<compile_context>
chip_gen: v5e
topology: v5e:2x2
jax: 0.10.0
libtpu: 0.0.40
codegen_flags: <defaults>
</compile_context>

<pallas_src>
import math
import functools

import jax
import jax.numpy as jnp
from jax import lax
from jax.experimental import pallas as pl
from jax.experimental.pallas import tpu as pltpu


# ----------------------------- Pallas kernel ------------------------------- #
def _foretran_kernel(x_ref,
                     wqkv_ref, bqkv_ref,
                     wo3_ref, vec4_ref,
                     w1_ref, b1_ref, w2_ref,
                     o_ref,
                     *, nhead: int, mxu_dtype):
    x = x_ref[...].astype(jnp.float32)                 # (T, D): one batch element
    T, D = x.shape
    hd = D // nhead
    scale = 1.0 / math.sqrt(hd)

    # --- fused QKV in-projection: one 2-D MXU matmul (bias add in f32) ---
    qkv = jnp.dot(x.astype(mxu_dtype), wqkv_ref[...],
                  preferred_element_type=jnp.float32) + bqkv_ref[...]      # (T, 3D)

    # --- head-major (H, T, hd) operands (static lane slices + leading-axis stack).
    #     At production D the slice offsets are 128-aligned (views).           ---
    def head_stack(off):
        return jnp.stack(
            [qkv[:, off + h * hd: off + (h + 1) * hd] for h in range(nhead)], axis=0)

    qh = head_stack(0 * D).astype(mxu_dtype)            # (H, T, hd)
    kh = head_stack(1 * D).astype(mxu_dtype)
    vh = head_stack(2 * D).astype(mxu_dtype)

    # --- attention: ONE batched dot per stage, heads = leading batch dim ---
    dn_qk = (((2,), (2,)), ((0,), (0,)))                 # 'hqd,hkd->hqk'
    dn_pv = (((2,), (1,)), ((0,), (0,)))                 # 'hqk,hkd->hqd'
    s = lax.dot_general(qh, kh, dn_qk,
                        preferred_element_type=jnp.float32) * scale        # (H, T, T)
    s = s - jnp.max(s, axis=-1, keepdims=True)           # f32 softmax statistics
    p = jnp.exp(s)
    den = jnp.sum(p, axis=-1, keepdims=True)
    r = pl.reciprocal(den, approx=True)                  # EUP slot
    r = r * (2.0 - den * r)                              # one Newton step -> f32-exact
    p = p * r
    o = lax.dot_general(p.astype(mxu_dtype), vh, dn_pv,
                        preferred_element_type=jnp.float32)                # (H, T, hd)

    # --- packed small vectors: rows = [bo, ln_gamma, ln_beta, b2] ---
    vec4 = vec4_ref[...]
    bo, ln_g, ln_b, b2 = vec4[0:1, :], vec4[1:2, :], vec4[2:3, :], vec4[3:4, :]

    # --- output projection batched over heads; head concat absorbed into the sum over
    #     the (leading) head axis: sum_h O_h @ Wo^T[h*hd:(h+1)*hd, :] == concat @ Wo^T ---
    proj = lax.dot_general(o.astype(mxu_dtype), wo3_ref[...], dn_pv,
                           preferred_element_type=jnp.float32)             # (H, T, D)
    attn = jnp.sum(proj, axis=0) + bo                    # (T, D)

    # --- residual + LayerNorm (eps=1e-5, f32 stats); dropout = identity in eval ---
    y = attn + x
    mu = jnp.mean(y, axis=-1, keepdims=True)
    yc = y - mu
    var = jnp.mean(yc * yc, axis=-1, keepdims=True)
    y = yc * lax.rsqrt(var + 1e-5) * ln_g + ln_b

    # --- MLP: Linear(D->DFF) + ReLU + Linear(DFF->D) ---
    h1 = jnp.dot(y.astype(mxu_dtype), w1_ref[...],
                 preferred_element_type=jnp.float32) + b1_ref[...]
    h1 = jnp.maximum(h1, 0.0)
    out = jnp.dot(h1.astype(mxu_dtype), w2_ref[...],
                  preferred_element_type=jnp.float32) + b2

    o_ref[...] = out.astype(o_ref.dtype)


# ------------------------------- Wrapper ------------------------------------ #
def foretran_layer(x, params, *, nhead: int, mxu_dtype=jnp.float32):
    """x: [B, T, D] float32.  params: dict of torch-shaped parameters.

    mxu_dtype: dtype of MXU operands (jnp.float32 for exact parity, jnp.bfloat16 for the
    production MXU path).  Accumulation and all elementwise math stay float32.
    """
    B, T, D = x.shape
    H = nhead
    hd = D // H
    DFF = params["w1"].shape[0]

    # Torch (out_features, in_features) weights -> (in, out); fuse QKV; head-major Wo.
    wqkv = jnp.concatenate(
        [params["wq"].T, params["wk"].T, params["wv"].T], axis=1).astype(mxu_dtype)  # (D, 3D)
    bqkv = jnp.concatenate(
        [params["bq"], params["bk"], params["bv"]]).reshape(1, 3 * D).astype(jnp.float32)
    wo3 = params["wo"].T.reshape(H, hd, D).astype(mxu_dtype)               # (H, hd, D)
    w1_t = params["w1"].T.astype(mxu_dtype)                                # (D, DFF)
    w2_t = params["w2"].T.astype(mxu_dtype)                                # (DFF, D)
    b1 = params["b1"].reshape(1, DFF).astype(jnp.float32)
    vec4 = jnp.stack([params["bo"], params["ln_g"],
                      params["ln_b"], params["b2"]], axis=0).astype(jnp.float32)  # (4, D)

    weights = [wqkv, bqkv, wo3, vec4, w1_t, b1, w2_t]

    def const_spec(a):
        # Grid-invariant index_map: DMA'd once, reused for every grid step.
        nd = a.ndim
        return pl.BlockSpec(a.shape, lambda i, _nd=nd: (0,) * _nd)

    # Per-generation VMEM budget (explicit limit: v5e default scoped is only 16 MiB,
    # v7x physical is 64 MiB).  Generous headroom over the actual working set.
    try:
        vmem_cap = int(pltpu.get_tpu_info().vmem_capacity_bytes)
    except Exception:
        vmem_cap = 64 << 20
    weight_bytes = sum(int(w.size) * w.dtype.itemsize for w in weights)
    act_bytes = 4 * (4 * T * D + 3 * T * D + H * T * T * 2 + 2 * T * DFF)
    vmem_limit = int(min(max(2 * weight_bytes + 2 * act_bytes + (1 << 20), 16 << 20),
                         vmem_cap // 2))

    # Advisory cost estimate for XLA's scheduler around the custom call.
    flops = int(2 * B * T * D * (4 * D + 2 * DFF) + 4 * B * H * T * T * hd)
    cost = pl.CostEstimate(
        flops=flops,
        transcendentals=int(B * H * T * T),
        bytes_accessed=int(x.size * x.dtype.itemsize + weight_bytes
                           + B * T * D * x.dtype.itemsize),
    )

    kernel = functools.partial(_foretran_kernel, nhead=H, mxu_dtype=mxu_dtype)

    out = pl.pallas_call(
        kernel,
        out_shape=jax.ShapeDtypeStruct((B, T, D), x.dtype),
        grid_spec=pltpu.PrefetchScalarGridSpec(
            num_scalar_prefetch=0,
            grid=(B,),   # one batch element (T rows) per grid step
            in_specs=[pl.BlockSpec((None, T, D), lambda i: (i, 0, 0))]
                     + [const_spec(w) for w in weights],
            out_specs=pl.BlockSpec((None, T, D), lambda i: (i, 0, 0)),
        ),
        compiler_params=pltpu.CompilerParams(
            # "parallel": both TensorCores on v7x; plain pipelined loop on v5e/v6e.
            dimension_semantics=("parallel",),
            vmem_limit_bytes=vmem_limit,
        ),
        cost_estimate=cost,
    )(x, *weights)

    return out


# --------------------------- Pure-JAX reference ----------------------------- #
def foretran_reference(x, p, *, nhead: int):
    B, T, D = x.shape
    hd = D // nhead
    with jax.default_matmul_precision("float32"):
        q = x @ p["wq"].T + p["bq"]
        k = x @ p["wk"].T + p["bk"]
        v = x @ p["wv"].T + p["bv"]

        def split(a):  # (B, T, D) -> (B, nhead, T, hd)
            return a.reshape(B, T, nhead, hd).transpose(0, 2, 1, 3)

        qh, kh, vh = split(q), split(k), split(v)
        s = jnp.einsum("bhqd,bhkd->bhqk", qh, kh) / math.sqrt(hd)
        a = jax.nn.softmax(s, axis=-1)
        o = jnp.einsum("bhqk,bhkd->bhqd", a, vh).transpose(0, 2, 1, 3).reshape(B, T, D)
        attn = o @ p["wo"].T + p["bo"]

        y = attn + x
        mu = jnp.mean(y, axis=-1, keepdims=True)
        var = jnp.mean((y - mu) ** 2, axis=-1, keepdims=True)
        y = (y - mu) / jnp.sqrt(var + 1e-5) * p["ln_g"] + p["ln_b"]

        h1 = jnp.maximum(y @ p["w1"].T + p["b1"], 0.0)
        return h1 @ p["w2"].T + p["b2"]


# --------------------------------- Main -------------------------------------- #
if __name__ == "__main__":
    B, T, D, NHEAD, DFF = 2, 8, 32, 4, 64   # dim_feedforward = [32, 64, 32]

    key = jax.random.PRNGKey(0)
    keys = jax.random.split(key, 16)

    def init(k, shape, scale=0.05):
        return (scale * jax.random.normal(k, shape)).astype(jnp.float32)

    # Torch-shaped parameters (Linear weights are (out_features, in_features)).
    params = {
        "wq": init(keys[0], (D, D)), "bq": init(keys[1], (D,)),
        "wk": init(keys[2], (D, D)), "bk": init(keys[3], (D,)),
        "wv": init(keys[4], (D, D)), "bv": init(keys[5], (D,)),
        "wo": init(keys[6], (D, D)), "bo": init(keys[7], (D,)),
        "ln_g": jnp.ones((D,), jnp.float32), "ln_b": jnp.zeros((D,), jnp.float32),
        "w1": init(keys[8], (DFF, D)), "b1": init(keys[9], (DFF,)),
        "w2": init(keys[10], (D, DFF)), "b2": init(keys[11], (D,)),
    }

    h_lower = jax.random.normal(keys[12], (B, T, D), dtype=jnp.float32)

    ref = foretran_reference(h_lower, params, nhead=NHEAD)

    # f32 MXU path.  Tolerance headroom covers MXU f32 multi-pass vs the HIGHEST-precision
    # XLA reference; with the Newton-refined softmax reciprocal the expected diff is ~1e-5.
    out = jax.block_until_ready(foretran_layer(h_lower, params, nhead=NHEAD))
    assert out.shape == (B, T, D)
    assert jnp.allclose(out, ref, rtol=2e-3, atol=2e-3), "f32 kernel mismatch vs reference"

    # bf16 MXU path (production dtype for the matmul operands; elementwise math stays f32).
    out_bf16 = jax.block_until_ready(
        foretran_layer(h_lower, params, nhead=NHEAD, mxu_dtype=jnp.bfloat16))
    assert out_bf16.shape == (B, T, D)
    assert jnp.allclose(out_bf16, ref, rtol=5e-2, atol=5e-2), "bf16 kernel mismatch vs reference"

    # TODO(synk): autoregressive / 'input' attention branches, BatchNorm1d mode and
    # training-mode dropout are not exercised (default config is ['layer'] + LayerNorm,
    # parallel path, eval).
    print("KERNEL_OK")
</pallas_src>

<mosaic_0001>
module attributes {stable_mosaic.version = 11 : i64} {
  func.func @_foretran_kernel(%arg0: i32, %arg1: memref<1x8x32xf32, #tpu.memory_space<vmem>>, %arg2: memref<32x96xf32, #tpu.memory_space<vmem>>, %arg3: memref<1x96xf32, #tpu.memory_space<vmem>>, %arg4: memref<4x8x32xf32, #tpu.memory_space<vmem>>, %arg5: memref<4x32xf32, #tpu.memory_space<vmem>>, %arg6: memref<32x64xf32, #tpu.memory_space<vmem>>, %arg7: memref<1x64xf32, #tpu.memory_space<vmem>>, %arg8: memref<64x32xf32, #tpu.memory_space<vmem>>, %arg9: memref<1x8x32xf32, #tpu.memory_space<vmem>>) attributes {dimension_semantics = [#tpu.dimension_semantics<parallel>], iteration_bounds = array<i64: 2>, scalar_prefetch = 0 : i64, scratch_operands = 0 : i64, tpu.core_type = #tpu.core_type<tc>, window_params = [{transform_indices = @transform_0, window_bounds = array<i64: 1, 8, 32>}, {pipeline_mode = #tpu.pipeline_mode<synchronous>, transform_indices = @transform_1, window_bounds = array<i64: 32, 96>}, {pipeline_mode = #tpu.pipeline_mode<synchronous>, transform_indices = @transform_2, window_bounds = array<i64: 1, 96>}, {pipeline_mode = #tpu.pipeline_mode<synchronous>, transform_indices = @transform_3, window_bounds = array<i64: 4, 8, 32>}, {pipeline_mode = #tpu.pipeline_mode<synchronous>, transform_indices = @transform_4, window_bounds = array<i64: 4, 32>}, {pipeline_mode = #tpu.pipeline_mode<synchronous>, transform_indices = @transform_5, window_bounds = array<i64: 32, 64>}, {pipeline_mode = #tpu.pipeline_mode<synchronous>, transform_indices = @transform_6, window_bounds = array<i64: 1, 64>}, {pipeline_mode = #tpu.pipeline_mode<synchronous>, transform_indices = @transform_7, window_bounds = array<i64: 64, 32>}, {transform_indices = @transform_8, window_bounds = array<i64: 1, 8, 32>}]} {
    %c0 = arith.constant 0 : index
    %c0_0 = arith.constant 0 : index
    %c0_1 = arith.constant 0 : index
    %0 = vector.load %arg1[%c0, %c0_0, %c0_1] : memref<1x8x32xf32, #tpu.memory_space<vmem>>, vector<1x8x32xf32>
    %1 = vector.shape_cast %0 : vector<1x8x32xf32> to vector<8x32xf32>
    %c0_2 = arith.constant 0 : index
    %c0_3 = arith.constant 0 : index
    %2 = vector.load %arg2[%c0_2, %c0_3] : memref<32x96xf32, #tpu.memory_space<vmem>>, vector<32x96xf32>
    %cst = arith.constant dense<0.000000e+00> : vector<8x96xf32>
    %3 = tpu.matmul %1, %2, %cst {dimension_numbers = #tpu.dot_dimension_numbers<[1], [0], [0], [1], [0, 0, 1, 1], [], []>} : vector<8x32xf32>, vector<32x96xf32>, vector<8x96xf32> -> vector<8x96xf32>
    %c0_4 = arith.constant 0 : index
    %c0_5 = arith.constant 0 : index
    %4 = vector.load %arg3[%c0_4, %c0_5] : memref<1x96xf32, #tpu.memory_space<vmem>>, vector<1x96xf32>
    %5 = vector.broadcast %4 : vector<1x96xf32> to vector<8x96xf32>
    %6 = arith.addf %3, %5 : vector<8x96xf32>
    %7 = vector.extract_strided_slice %6 {offsets = [0, 0], sizes = [8, 8], strides = [1, 1]} : vector<8x96xf32> to vector<8x8xf32>
    %8 = vector.extract_strided_slice %6 {offsets = [0, 8], sizes = [8, 8], strides = [1, 1]} : vector<8x96xf32> to vector<8x8xf32>
    %9 = vector.extract_strided_slice %6 {offsets = [0, 16], sizes = [8, 8], strides = [1, 1]} : vector<8x96xf32> to vector<8x8xf32>
    %10 = vector.extract_strided_slice %6 {offsets = [0, 24], sizes = [8, 8], strides = [1, 1]} : vector<8x96xf32> to vector<8x8xf32>
    %11 = vector.shape_cast %7 : vector<8x8xf32> to vector<1x8x8xf32>
    %12 = vector.shape_cast %8 : vector<8x8xf32> to vector<1x8x8xf32>
    %13 = vector.shape_cast %9 : vector<8x8xf32> to vector<1x8x8xf32>
    %14 = vector.shape_cast %10 : vector<8x8xf32> to vector<1x8x8xf32>
    %15 = tpu.concatenate %11, %12, %13, %14 in 0 : vector<1x8x8xf32>, vector<1x8x8xf32>, vector<1x8x8xf32>, vector<1x8x8xf32> -> vector<4x8x8xf32>
    %16 = vector.extract_strided_slice %6 {offsets = [0, 32], sizes = [8, 8], strides = [1, 1]} : vector<8x96xf32> to vector<8x8xf32>
    %17 = vector.extract_strided_slice %6 {offsets = [0, 40], sizes = [8, 8], strides = [1, 1]} : vector<8x96xf32> to vector<8x8xf32>
    %18 = vector.extract_strided_slice %6 {offsets = [0, 48], sizes = [8, 8], strides = [1, 1]} : vector<8x96xf32> to vector<8x8xf32>
    %19 = vector.extract_strided_slice %6 {offsets = [0, 56], sizes = [8, 8], strides = [1, 1]} : vector<8x96xf32> to vector<8x8xf32>
    %20 = vector.shape_cast %16 : vector<8x8xf32> to vector<1x8x8xf32>
    %21 = vector.shape_cast %17 : vector<8x8xf32> to vector<1x8x8xf32>
    %22 = vector.shape_cast %18 : vector<8x8xf32> to vector<1x8x8xf32>
    %23 = vector.shape_cast %19 : vector<8x8xf32> to vector<1x8x8xf32>
    %24 = tpu.concatenate %20, %21, %22, %23 in 0 : vector<1x8x8xf32>, vector<1x8x8xf32>, vector<1x8x8xf32>, vector<1x8x8xf32> -> vector<4x8x8xf32>
    %25 = vector.extract_strided_slice %6 {offsets = [0, 64], sizes = [8, 8], strides = [1, 1]} : vector<8x96xf32> to vector<8x8xf32>
    %26 = vector.extract_strided_slice %6 {offsets = [0, 72], sizes = [8, 8], strides = [1, 1]} : vector<8x96xf32> to vector<8x8xf32>
    %27 = vector.extract_strided_slice %6 {offsets = [0, 80], sizes = [8, 8], strides = [1, 1]} : vector<8x96xf32> to vector<8x8xf32>
    %28 = vector.extract_strided_slice %6 {offsets = [0, 88], sizes = [8, 8], strides = [1, 1]} : vector<8x96xf32> to vector<8x8xf32>
    %29 = vector.shape_cast %25 : vector<8x8xf32> to vector<1x8x8xf32>
    %30 = vector.shape_cast %26 : vector<8x8xf32> to vector<1x8x8xf32>
    %31 = vector.shape_cast %27 : vector<8x8xf32> to vector<1x8x8xf32>
    %32 = vector.shape_cast %28 : vector<8x8xf32> to vector<1x8x8xf32>
    %33 = tpu.concatenate %29, %30, %31, %32 in 0 : vector<1x8x8xf32>, vector<1x8x8xf32>, vector<1x8x8xf32>, vector<1x8x8xf32> -> vector<4x8x8xf32>
    %cst_6 = arith.constant dense<0.000000e+00> : vector<4x8x8xf32>
    %34 = tpu.matmul %15, %24, %cst_6 {dimension_numbers = #tpu.dot_dimension_numbers<[2], [2], [1], [1], [0, 0, 0, 1, 1, 1], [0], [0]>} : vector<4x8x8xf32>, vector<4x8x8xf32>, vector<4x8x8xf32> -> vector<4x8x8xf32>
    %cst_7 = arith.constant 0.353553385 : f32
    %35 = vector.broadcast %cst_7 : f32 to vector<4x8x8xf32>
    %36 = arith.mulf %34, %35 : vector<4x8x8xf32>
    %cst_8 = arith.constant dense<0xFF800000> : vector<4x8xf32>
    %37 = vector.multi_reduction <maximumf>, %36, %cst_8 [2] : vector<4x8x8xf32> to vector<4x8xf32>
    %38 = vector.shape_cast %37 : vector<4x8xf32> to vector<4x8x1xf32>
    %39 = vector.broadcast %38 : vector<4x8x1xf32> to vector<4x8x8xf32>
    %40 = arith.subf %36, %39 : vector<4x8x8xf32>
    %41 = math.exp %40 : vector<4x8x8xf32>
    %cst_9 = arith.constant dense<0.000000e+00> : vector<4x8xf32>
    %42 = vector.multi_reduction <add>, %41, %cst_9 [2] : vector<4x8x8xf32> to vector<4x8xf32>
    %43 = vector.shape_cast %42 : vector<4x8xf32> to vector<4x8x1xf32>
    %44 = tpu.reciprocal %43 {approx = true} : vector<4x8x1xf32> -> vector<4x8x1xf32>
    %45 = arith.mulf %43, %44 : vector<4x8x1xf32>
    %cst_10 = arith.constant 2.000000e+00 : f32
    %46 = vector.broadcast %cst_10 : f32 to vector<4x8x1xf32>
    %47 = arith.subf %46, %45 : vector<4x8x1xf32>
    %48 = arith.mulf %44, %47 : vector<4x8x1xf32>
    %49 = vector.broadcast %48 : vector<4x8x1xf32> to vector<4x8x8xf32>
    %50 = arith.mulf %41, %49 : vector<4x8x8xf32>
    %cst_11 = arith.constant dense<0.000000e+00> : vector<4x8x8xf32>
    %51 = tpu.matmul %50, %33, %cst_11 {dimension_numbers = #tpu.dot_dimension_numbers<[2], [1], [1], [2], [0, 0, 0, 1, 1, 2], [0], [0]>} : vector<4x8x8xf32>, vector<4x8x8xf32>, vector<4x8x8xf32> -> vector<4x8x8xf32>
    %c0_12 = arith.constant 0 : index
    %c0_13 = arith.constant 0 : index
    %52 = vector.load %arg5[%c0_12, %c0_13] : memref<4x32xf32, #tpu.memory_space<vmem>>, vector<4x32xf32>
    %53 = vector.extract_strided_slice %52 {offsets = [0, 0], sizes = [1, 32], strides = [1, 1]} : vector<4x32xf32> to vector<1x32xf32>
    %54 = vector.extract_strided_slice %52 {offsets = [1, 0], sizes = [1, 32], strides = [1, 1]} : vector<4x32xf32> to vector<1x32xf32>
    %55 = vector.extract_strided_slice %52 {offsets = [2, 0], sizes = [1, 32], strides = [1, 1]} : vector<4x32xf32> to vector<1x32xf32>
    %56 = vector.extract_strided_slice %52 {offsets = [3, 0], sizes = [1, 32], strides = [1, 1]} : vector<4x32xf32> to vector<1x32xf32>
    %c0_14 = arith.constant 0 : index
    %c0_15 = arith.constant 0 : index
    %c0_16 = arith.constant 0 : index
    %57 = vector.load %arg4[%c0_14, %c0_15, %c0_16] : memref<4x8x32xf32, #tpu.memory_space<vmem>>, vector<4x8x32xf32>
    %cst_17 = arith.constant dense<0.000000e+00> : vector<4x8x32xf32>
    %58 = tpu.matmul %51, %57, %cst_17 {dimension_numbers = #tpu.dot_dimension_numbers<[2], [1], [1], [2], [0, 0, 0, 1, 1, 2], [0], [0]>} : vector<4x8x8xf32>, vector<4x8x32xf32>, vector<4x8x32xf32> -> vector<4x8x32xf32>
    %cst_18 = arith.constant dense<0.000000e+00> : vector<8x32xf32>
    %59 = vector.multi_reduction <add>, %58, %cst_18 [0] : vector<4x8x32xf32> to vector<8x32xf32>
    %60 = vector.broadcast %53 : vector<1x32xf32> to vector<8x32xf32>
    %61 = arith.addf %59, %60 : vector<8x32xf32>
    %62 = arith.addf %61, %1 : vector<8x32xf32>
    %cst_19 = arith.constant dense<0.000000e+00> : vector<8xf32>
    %63 = vector.multi_reduction <add>, %62, %cst_19 [1] : vector<8x32xf32> to vector<8xf32>
    %64 = vector.shape_cast %63 : vector<8xf32> to vector<8x1xf32>
    %cst_20 = arith.constant 3.200000e+01 : f32
    %65 = vector.broadcast %cst_20 : f32 to vector<8x1xf32>
    %66 = arith.divf %64, %65 : vector<8x1xf32>
    %67 = vector.broadcast %66 : vector<8x1xf32> to vector<8x32xf32>
    %68 = arith.subf %62, %67 : vector<8x32xf32>
    %69 = arith.mulf %68, %68 : vector<8x32xf32>
    %cst_21 = arith.constant dense<0.000000e+00> : vector<8xf32>
    %70 = vector.multi_reduction <add>, %69, %cst_21 [1] : vector<8x32xf32> to vector<8xf32>
    %71 = vector.shape_cast %70 : vector<8xf32> to vector<8x1xf32>
    %cst_22 = arith.constant 3.200000e+01 : f32
    %72 = vector.broadcast %cst_22 : f32 to vector<8x1xf32>
    %73 = arith.divf %71, %72 : vector<8x1xf32>
    %cst_23 = arith.constant 9.99999974E-6 : f32
    %74 = vector.broadcast %cst_23 : f32 to vector<8x1xf32>
    %75 = arith.addf %73, %74 : vector<8x1xf32>
    %76 = math.rsqrt %75 : vector<8x1xf32>
    %77 = vector.broadcast %76 : vector<8x1xf32> to vector<8x32xf32>
    %78 = arith.mulf %68, %77 : vector<8x32xf32>
    %79 = vector.broadcast %54 : vector<1x32xf32> to vector<8x32xf32>
    %80 = arith.mulf %78, %79 : vector<8x32xf32>
    %81 = vector.broadcast %55 : vector<1x32xf32> to vector<8x32xf32>
    %82 = arith.addf %80, %81 : vector<8x32xf32>
    %c0_24 = arith.constant 0 : index
    %c0_25 = arith.constant 0 : index
    %83 = vector.load %arg6[%c0_24, %c0_25] : memref<32x64xf32, #tpu.memory_space<vmem>>, vector<32x64xf32>
    %cst_26 = arith.constant dense<0.000000e+00> : vector<8x64xf32>
    %84 = tpu.matmul %82, %83, %cst_26 {dimension_numbers = #tpu.dot_dimension_numbers<[1], [0], [0], [1], [0, 0, 1, 1], [], []>} : vector<8x32xf32>, vector<32x64xf32>, vector<8x64xf32> -> vector<8x64xf32>
    %c0_27 = arith.constant 0 : index
    %c0_28 = arith.constant 0 : index
    %85 = vector.load %arg7[%c0_27, %c0_28] : memref<1x64xf32, #tpu.memory_space<vmem>>, vector<1x64xf32>
    %86 = vector.broadcast %85 : vector<1x64xf32> to vector<8x64xf32>
    %87 = arith.addf %84, %86 : vector<8x64xf32>
    %cst_29 = arith.constant 0.000000e+00 : f32
    %88 = vector.broadcast %cst_29 : f32 to vector<8x64xf32>
    %89 = arith.maximumf %87, %88 : vector<8x64xf32>
    %c0_30 = arith.constant 0 : index
    %c0_31 = arith.constant 0 : index
    %90 = vector.load %arg8[%c0_30, %c0_31] : memref<64x32xf32, #tpu.memory_space<vmem>>, vector<64x32xf32>
    %cst_32 = arith.constant dense<0.000000e+00> : vector<8x32xf32>
    %91 = tpu.matmul %89, %90, %cst_32 {dimension_numbers = #tpu.dot_dimension_numbers<[1], [0], [0], [1], [0, 0, 1, 1], [], []>} : vector<8x64xf32>, vector<64x32xf32>, vector<8x32xf32> -> vector<8x32xf32>
    %92 = vector.broadcast %56 : vector<1x32xf32> to vector<8x32xf32>
    %93 = arith.addf %91, %92 : vector<8x32xf32>
    %c0_33 = arith.constant 0 : index
    %c0_34 = arith.constant 0 : index
    %c0_35 = arith.constant 0 : index
    %94 = vector.load %arg9[%c0_33, %c0_34, %c0_35] : memref<1x8x32xf32, #tpu.memory_space<vmem>>, vector<1x8x32xf32>
    %95 = vector.shape_cast %94 : vector<1x8x32xf32> to vector<8x32xf32>
    %96 = vector.shape_cast %93 : vector<8x32xf32> to vector<1x8x32xf32>
    tpu.vector_store %arg9[%c0_33, %c0_34, %c0_35], %96 {strides = array<i32>} : memref<1x8x32xf32, #tpu.memory_space<vmem>>, vector<1x8x32xf32>,
    return
  }
  func.func @transform_0(%arg0: i32) -> (i32, i32, i32) {
    %c0_i32 = arith.constant 0 : i32
    %c0_i32_0 = arith.constant 0 : i32
    %c0_i32_1 = arith.constant 0 : i32
    return %arg0, %c0_i32, %c0_i32_0 : i32, i32, i32
  }
  func.func @transform_1(%arg0: i32) -> (i32, i32) {
    %c0_i32 = arith.constant 0 : i32
    %c0_i32_0 = arith.constant 0 : i32
    %c0_i32_1 = arith.constant 0 : i32
    return %c0_i32, %c0_i32_0 : i32, i32
  }
  func.func @transform_2(%arg0: i32) -> (i32, i32) {
    %c0_i32 = arith.constant 0 : i32
    %c0_i32_0 = arith.constant 0 : i32
    %c0_i32_1 = arith.constant 0 : i32
    return %c0_i32, %c0_i32_0 : i32, i32
  }
  func.func @transform_3(%arg0: i32) -> (i32, i32, i32) {
    %c0_i32 = arith.constant 0 : i32
    %c0_i32_0 = arith.constant 0 : i32
    %c0_i32_1 = arith.constant 0 : i32
    %c0_i32_2 = arith.constant 0 : i32
    return %c0_i32, %c0_i32_0, %c0_i32_1 : i32, i32, i32
  }
  func.func @transform_4(%arg0: i32) -> (i32, i32) {
    %c0_i32 = arith.constant 0 : i32
    %c0_i32_0 = arith.constant 0 : i32
    %c0_i32_1 = arith.constant 0 : i32
    return %c0_i32, %c0_i32_0 : i32, i32
  }
  func.func @transform_5(%arg0: i32) -> (i32, i32) {
    %c0_i32 = arith.constant 0 : i32
    %c0_i32_0 = arith.constant 0 : i32
    %c0_i32_1 = arith.constant 0 : i32
    return %c0_i32, %c0_i32_0 : i32, i32
  }
  func.func @transform_6(%arg0: i32) -> (i32, i32) {
    %c0_i32 = arith.constant 0 : i32
    %c0_i32_0 = arith.constant 0 : i32
    %c0_i32_1 = arith.constant 0 : i32
    return %c0_i32, %c0_i32_0 : i32, i32
  }
  func.func @transform_7(%arg0: i32) -> (i32, i32) {
    %c0_i32 = arith.constant 0 : i32
    %c0_i32_0 = arith.constant 0 : i32
    %c0_i32_1 = arith.constant 0 : i32
    return %c0_i32, %c0_i32_0 : i32, i32
  }
  func.func @transform_8(%arg0: i32) -> (i32, i32, i32) {
    %c0_i32 = arith.constant 0 : i32
    %c0_i32_0 = arith.constant 0 : i32
    %c0_i32_1 = arith.constant 0 : i32
    return %arg0, %c0_i32, %c0_i32_0 : i32, i32, i32
  }
}

</mosaic_0001>

<llo_original>
// kernel: tpu_custom_call.1
$region0: #{tpu_custom_call.1}
  #allocation0 [shape = 'u32[]', space=smem, size = 0x4, offset = 0x4, fixed_abs, tag = 'smem constant byte address 0x4 - core index']
  #allocation1 [shape = 'u32[72,128]{1,0:T(1,128)}', space=vmem, size = 0x9000, scoped, tag = 'internal scratch']
  %s0 = inlined_call_operand.hbm [shape: f32[2,8,32], index: 0, kind: input, shape index: {}]
  %s1 = inlined_call_operand.vmem [shape: f32[32,96], index: 1, kind: input, shape index: {}]
  %s2 = inlined_call_operand.vmem [shape: f32[1,96], index: 2, kind: input, shape index: {}]
  %s3 = inlined_call_operand.vmem [shape: f32[4,8,32], index: 3, kind: input, shape index: {}]
  %s4 = inlined_call_operand.hbm [shape: f32[4,32], index: 4, kind: input, shape index: {}]
  %s5 = inlined_call_operand.vmem [shape: f32[32,64], index: 5, kind: input, shape index: {}]
  %s6 = inlined_call_operand.vmem [shape: f32[1,64], index: 6, kind: input, shape index: {}]
  %s7 = inlined_call_operand.vmem [shape: f32[64,32], index: 7, kind: input, shape index: {}]
  %s8 = inlined_call_operand.hbm [shape: f32[2,8,32], index: 8, kind: output, shape index: {}]
  %s9 = sld [smem:[#allocation0]]
  $region73: #{tpu_custom_call.1} parent=0
    _
  %s11 = ssub.s32 1, %s9
  %s12 = scalar_select 0, %s11, %s9
  $region1: #{tpu_custom_call.1} parent=0
    #allocation2 [shape = 'u8[8192]{0}', space=vmem, size = 0x2000, scoped, tag = 'input window, operand 0']
    #allocation3 [shape = 's32[2]{0}', space=sflag, size = 0x8, scoped, tag = 'scoped memory for tpu_custom_call.1']
    #allocation4 [shape = 's32[2]{0}', space=sflag, size = 0x8, scoped, tag = 'scoped memory for tpu_custom_call.1']
    #allocation5 [shape = 'u8[2048]{0}', space=vmem, size = 0x800, scoped, tag = 'input window, operand 4, single buffered']
    #allocation6 [shape = 's32[1]{0}', space=sflag, size = 0x4, scoped, tag = 'scoped memory for tpu_custom_call.1']
    #allocation7 [shape = 'u8[8192]{0}', space=vmem, size = 0x2000, scoped, tag = 'output window, operand 0']
    %13 = vsyncpa [#allocation3], 0
    %s14 = scalar_lea.sflag [#allocation3], 1
    %15 = vsyncpa %s14, 0
    %16 = vsyncpa [#allocation6], 0
    %17 = vsyncpa [#allocation4], 0
    %s18 = scalar_lea.sflag [#allocation4], 1
    %19 = vsyncpa %s18, 0
    loop: start=0, step=1, limit=4
    $region2: #{tpu_custom_call.1} parent=1 // loop_pre_header
      _
    $region3: #{tpu_custom_call.1} parent=1 // loop_header
      %s21 = sphi 0, %s25
      %p22 = scmp.ge.s32.totalorder %s21, 4
      %s31 = sphi 0, %s33
      %s34 = sphi 0, %s31
      %s35 = sphi 0, %s34
      %s51 = sphi 0, %s35
      %s55 = sphi 0, %s55
      %s57 = sphi 0, %s55
      %s58 = sphi 0, %s57
      %s72 = sphi 0, %s58
      %s76 = sphi 0, %s76
      %s78 = sphi 0, %s76
      %s79 = sphi 0, %s78
      %s93 = sphi 0, %s79
      %s97 = sphi 0, %s97
      %s99 = sphi 0, %s97
      %s100 = sphi 0, %s99
      %s114 = sphi 0, %s100
      %s118 = sphi 0, %s118
      %s120 = sphi 0, %s118
      %s121 = sphi 0, %s120
      %s135 = sphi 0, %s121
      %s139 = sphi 0, %s139
      %s141 = sphi 0, %s139
      %s142 = sphi 0, %s141
      %s156 = sphi 0, %s142
      %s160 = sphi 0, %s160
      %s162 = sphi 0, %s160
      %s163 = sphi 0, %s162
      %s177 = sphi 0, %s163
      %s181 = sphi 0, %s181
      %s183 = sphi 0, %s181
      %s184 = sphi 0, %s183
      %s198 = sphi 0, %s184
      %s204 = sphi 0, %s206
      %s207 = sphi 0, %s204
      %s208 = sphi 0, %s207
      %s224 = sphi 0, %s208
    $region4: #{tpu_custom_call.1} parent=1 // loop_header_branch
      %24 = sbr.rel (%p22) target = $region8
    $region5: #{tpu_custom_call.1} parent=1 // loop_body
      %s26 = ssub.s32 %s21, 1
      %s27 = ssub.s32 %s21, 2
      %s28 = sadd.s32 %s21, 1
      %s29 = ssub.s32 %s21, %s28
      %p30 = scmp.eq.s32.totalorder %s29, 0
      %s32 = sadd.s32 %s31, 1
      %s33 = scalar_select %p30, %s31, %s32
      %p36 = pneg %p30
      %p37 = scmp.eq.s32.totalorder %s21, 1
      %p38 = por %p36, %p37
      %p39 = scmp.ne.s32.totalorder %s31, %s34
      %p40 = scmp.eq.s32.totalorder %s21, 0
      %p41 = por %p39, %p40
      %p42 = scmp.ne.s32.totalorder %s31, %s34
      %p43 = scmp.eq.s32.totalorder %s26, 1
      %p44 = por %p42, %p43
      %p45 = scmp.ne.s32.totalorder %s34, %s35
      %p46 = scmp.eq.s32.totalorder %s26, 0
      %p47 = por %p45, %p46
      %p48 = scmp.ne.s32.totalorder %s34, %s35
      %p49 = scmp.eq.s32.totalorder %s27, 1
      %p50 = por %p48, %p49
      %p52 = scmp.ne.s32.totalorder %s35, %s51
      %p53 = scmp.eq.s32.totalorder %s27, 0
      %p54 = por %p52, %p53
      %s56 = sadd.s32 %s55, 1
      %p59 = scmp.eq.s32.totalorder %s21, 1
      %p60 = scmp.ne.s32.totalorder %s55, %s57
      %p61 = scmp.eq.s32.totalorder %s21, 0
      %p62 = por %p60, %p61
      %p63 = scmp.ne.s32.totalorder %s55, %s57
      %p64 = scmp.eq.s32.totalorder %s26, 1
      %p65 = por %p63, %p64
      %p66 = scmp.ne.s32.totalorder %s57, %s58
      %p67 = scmp.eq.s32.totalorder %s26, 0
      %p68 = por %p66, %p67
      %p69 = scmp.ne.s32.totalorder %s57, %s58
      %p70 = scmp.eq.s32.totalorder %s27, 1
      %p71 = por %p69, %p70
      %p73 = scmp.ne.s32.totalorder %s58, %s72
      %p74 = scmp.eq.s32.totalorder %s27, 0
      %p75 = por %p73, %p74
      %s77 = sadd.s32 %s76, 1
      %p80 = scmp.eq.s32.totalorder %s21, 1
      %p81 = scmp.ne.s32.totalorder %s76, %s78
      %p82 = scmp.eq.s32.totalorder %s21, 0
      %p83 = por %p81, %p82
      %p84 = scmp.ne.s32.totalorder %s76, %s78
      %p85 = scmp.eq.s32.totalorder %s26, 1
      %p86 = por %p84, %p85
      %p87 = scmp.ne.s32.totalorder %s78, %s79
      %p88 = scmp.eq.s32.totalorder %s26, 0
      %p89 = por %p87, %p88
      %p90 = scmp.ne.s32.totalorder %s78, %s79
      %p91 = scmp.eq.s32.totalorder %s27, 1
      %p92 = por %p90, %p91
      %p94 = scmp.ne.s32.totalorder %s79, %s93
      %p95 = scmp.eq.s32.totalorder %s27, 0
      %p96 = por %p94, %p95
      %s98 = sadd.s32 %s97, 1
      %p101 = scmp.eq.s32.totalorder %s21, 1
      %p102 = scmp.ne.s32.totalorder %s97, %s99
      %p103 = scmp.eq.s32.totalorder %s21, 0
      %p104 = por %p102, %p103
      %p105 = scmp.ne.s32.totalorder %s97, %s99
      %p106 = scmp.eq.s32.totalorder %s26, 1
      %p107 = por %p105, %p106
      %p108 = scmp.ne.s32.totalorder %s99, %s100
      %p109 = scmp.eq.s32.totalorder %s26, 0
      %p110 = por %p108, %p109
      %p111 = scmp.ne.s32.totalorder %s99, %s100
      %p112 = scmp.eq.s32.totalorder %s27, 1
      %p113 = por %p111, %p112
      %p115 = scmp.ne.s32.totalorder %s100, %s114
      %p116 = scmp.eq.s32.totalorder %s27, 0
      %p117 = por %p115, %p116
      %s119 = sadd.s32 %s118, 1
      %p122 = scmp.eq.s32.totalorder %s21, 1
      %p123 = scmp.ne.s32.totalorder %s118, %s120
      %p124 = scmp.eq.s32.totalorder %s21, 0
      %p125 = por %p123, %p124
      %p126 = scmp.ne.s32.totalorder %s118, %s120
      %p127 = scmp.eq.s32.totalorder %s26, 1
      %p128 = por %p126, %p127
      %p129 = scmp.ne.s32.totalorder %s120, %s121
      %p130 = scmp.eq.s32.totalorder %s26, 0
      %p131 = por %p129, %p130
      %p132 = scmp.ne.s32.totalorder %s120, %s121
      %p133 = scmp.eq.s32.totalorder %s27, 1
      %p134 = por %p132, %p133
      %p136 = scmp.ne.s32.totalorder %s121, %s135
      %p137 = scmp.eq.s32.totalorder %s27, 0
      %p138 = por %p136, %p137
      %s140 = sadd.s32 %s139, 1
      %p143 = scmp.eq.s32.totalorder %s21, 1
      %p144 = scmp.ne.s32.totalorder %s139, %s141
      %p145 = scmp.eq.s32.totalorder %s21, 0
      %p146 = por %p144, %p145
      %p147 = scmp.ne.s32.totalorder %s139, %s141
      %p148 = scmp.eq.s32.totalorder %s26, 1
      %p149 = por %p147, %p148
      %p150 = scmp.ne.s32.totalorder %s141, %s142
      %p151 = scmp.eq.s32.totalorder %s26, 0
      %p152 = por %p150, %p151
      %p153 = scmp.ne.s32.totalorder %s141, %s142
      %p154 = scmp.eq.s32.totalorder %s27, 1
      %p155 = por %p153, %p154
      %p157 = scmp.ne.s32.totalorder %s142, %s156
      %p158 = scmp.eq.s32.totalorder %s27, 0
      %p159 = por %p157, %p158
      %s161 = sadd.s32 %s160, 1
      %p164 = scmp.eq.s32.totalorder %s21, 1
      %p165 = scmp.ne.s32.totalorder %s160, %s162
      %p166 = scmp.eq.s32.totalorder %s21, 0
      %p167 = por %p165, %p166
      %p168 = scmp.ne.s32.totalorder %s160, %s162
      %p169 = scmp.eq.s32.totalorder %s26, 1
      %p170 = por %p168, %p169
      %p171 = scmp.ne.s32.totalorder %s162, %s163
      %p172 = scmp.eq.s32.totalorder %s26, 0
      %p173 = por %p171, %p172
      %p174 = scmp.ne.s32.totalorder %s162, %s163
      %p175 = scmp.eq.s32.totalorder %s27, 1
      %p176 = por %p174, %p175
      %p178 = scmp.ne.s32.totalorder %s163, %s177
      %p179 = scmp.eq.s32.totalorder %s27, 0
      %p180 = por %p178, %p179
      %s182 = sadd.s32 %s181, 1
      %p185 = scmp.eq.s32.totalorder %s21, 1
      %p186 = scmp.ne.s32.totalorder %s181, %s183
      %p187 = scmp.eq.s32.totalorder %s21, 0
      %p188 = por %p186, %p187
      %p189 = scmp.ne.s32.totalorder %s181, %s183
      %p190 = scmp.eq.s32.totalorder %s26, 1
      %p191 = por %p189, %p190
      %p192 = scmp.ne.s32.totalorder %s183, %s184
      %p193 = scmp.eq.s32.totalorder %s26, 0
      %p194 = por %p192, %p193
      %p195 = scmp.ne.s32.totalorder %s183, %s184
      %p196 = scmp.eq.s32.totalorder %s27, 1
      %p197 = por %p195, %p196
      %p199 = scmp.ne.s32.totalorder %s184, %s198
      %p200 = scmp.eq.s32.totalorder %s27, 0
      %p201 = por %p199, %p200
      %s202 = ssub.s32 %s21, %s28
      %p203 = scmp.eq.s32.totalorder %s202, 0
      %s205 = sadd.s32 %s204, 1
      %s206 = scalar_select %p203, %s204, %s205
      %p209 = pneg %p203
      %p210 = scmp.eq.s32.totalorder %s21, 1
      %p211 = por %p209, %p210
      %p212 = scmp.ne.s32.totalorder %s204, %s207
      %p213 = scmp.eq.s32.totalorder %s21, 0
      %p214 = por %p212, %p213
      %p215 = scmp.ne.s32.totalorder %s204, %s207
      %p216 = scmp.eq.s32.totalorder %s26, 1
      %p217 = por %p215, %p216
      %p218 = scmp.ne.s32.totalorder %s207, %s208
      %p219 = scmp.eq.s32.totalorder %s26, 0
      %p220 = por %p218, %p219
      %p221 = scmp.ne.s32.totalorder %s207, %s208
      %p222 = scmp.eq.s32.totalorder %s27, 1
      %p223 = por %p221, %p222
      %p225 = scmp.ne.s32.totalorder %s208, %s224
      %p226 = scmp.eq.s32.totalorder %s27, 0
      %p227 = por %p225, %p226
      %p228 = scmp.le.s32.totalorder 1, %s21
      %p229 = scmp.lt.s32.totalorder %s21, 3
      %p230 = pnand %p228, %p229
      %p231 = pneg %p230
      // Predicated region
      $region9: #{tpu_custom_call.1} parent=5 // pred_check
        _
      $region10: #{tpu_custom_call.1} parent=5 // pred_check_branch
        %233 = sbr.rel (%p230) target = $region12
      $region11: #{tpu_custom_call.1} parent=5 // pred_region
        %s234 = ssub.s32 %s21, 1
        // Predicated region
        $region13: #{tpu_custom_call.1} parent=11 // pred_check
          %p235 = pneg %p68
        $region14: #{tpu_custom_call.1} parent=11 // pred_check_branch
          %237 = sbr.rel (%p235) target = $region16
        $region15: #{tpu_custom_call.1} parent=11 // pred_region
          _
        $region16: #{tpu_custom_call.1} parent=11 // pred_fallthru
          _
        // Predicated region
        $region17: #{tpu_custom_call.1} parent=11 // pred_check
          %p238 = pneg %p89
        $region18: #{tpu_custom_call.1} parent=11 // pred_check_branch
          %240 = sbr.rel (%p238) target = $region20
        $region19: #{tpu_custom_call.1} parent=11 // pred_region
          _
        $region20: #{tpu_custom_call.1} parent=11 // pred_fallthru
          _
        // Predicated region
        $region21: #{tpu_custom_call.1} parent=11 // pred_check
          %p241 = pneg %p110
        $region22: #{tpu_custom_call.1} parent=11 // pred_check_branch
          %243 = sbr.rel (%p241) target = $region24
        $region23: #{tpu_custom_call.1} parent=11 // pred_region
          _
        $region24: #{tpu_custom_call.1} parent=11 // pred_fallthru
          _
        // Predicated region
        $region25: #{tpu_custom_call.1} parent=11 // pred_check
          %p244 = pneg %p131
        $region26: #{tpu_custom_call.1} parent=11 // pred_check_branch
          %246 = sbr.rel (%p244) target = $region28
        $region27: #{tpu_custom_call.1} parent=11 // pred_region
          %248 = vsyncadd [#allocation6], 0
          %s250 = sshll.u32 %s4, 4
          %s251 = int_to_ptr.hbm [resolvable:$true] %s250
          %s252 = sshll.u32 [#allocation5], 4
          %s253 = int_to_ptr.vmem [resolvable:$true] %s252
          %255 = dma.hbm_to_vmem [thread:$0]  %s251, 64, %s253, [#allocation6]
        $region28: #{tpu_custom_call.1} parent=11 // pred_fallthru
          _
        // Predicated region
        $region29: #{tpu_custom_call.1} parent=11 // pred_check
          %p256 = pneg %p152
        $region30: #{tpu_custom_call.1} parent=11 // pred_check_branch
          %258 = sbr.rel (%p256) target = $region32
        $region31: #{tpu_custom_call.1} parent=11 // pred_region
          _
        $region32: #{tpu_custom_call.1} parent=11 // pred_fallthru
          _
        // Predicated region
        $region33: #{tpu_custom_call.1} parent=11 // pred_check
          %p259 = pneg %p173
        $region34: #{tpu_custom_call.1} parent=11 // pred_check_branch
          %261 = sbr.rel (%p259) target = $region36
        $region35: #{tpu_custom_call.1} parent=11 // pred_region
          _
        $region36: #{tpu_custom_call.1} parent=11 // pred_fallthru
          _
        // Predicated region
        $region37: #{tpu_custom_call.1} parent=11 // pred_check
          %p262 = pneg %p194
        $region38: #{tpu_custom_call.1} parent=11 // pred_check_branch
          %264 = sbr.rel (%p262) target = $region40
        $region39: #{tpu_custom_call.1} parent=11 // pred_region
          _
        $region40: #{tpu_custom_call.1} parent=11 // pred_fallthru
          _
      $region12: #{tpu_custom_call.1} parent=5 // pred_fallthru
        _
      %p265 = scmp.lt.s32.totalorder %s21, 2
      // Predicated region
      $region41: #{tpu_custom_call.1} parent=5 // pred_check
        %p266 = pneg %p265
      $region42: #{tpu_custom_call.1} parent=5 // pred_check_branch
        %268 = sbr.rel (%p266) target = $region44
      $region43: #{tpu_custom_call.1} parent=5 // pred_region
        // Predicated region
        $region45: #{tpu_custom_call.1} parent=43 // pred_check
          %p269 = pneg %p41
        $region46: #{tpu_custom_call.1} parent=43 // pred_check_branch
          %271 = sbr.rel (%p269) target = $region48
        $region47: #{tpu_custom_call.1} parent=43 // pred_region
          %s272 = sand.u32 %s31, 1
          %s273 = scalar_lea.sflag [#allocation3], %s272
          %s274 = sand.u32 %s31, 1
          %s275 = smul.addr %s274, 8
          %s276 = scalar_lea.vmem [#allocation2], %s275
          %278 = vsyncadd %s273, 0
          %s279 = smul.addr %s21, 8
          %s280 = scalar_lea.hbm %s0, %s279
          %s282 = sshll.u32 %s280, 4
          %s283 = int_to_ptr.hbm [resolvable:$true] %s282
          %s284 = sshll.u32 %s276, 4
          %s285 = int_to_ptr.vmem [resolvable:$true] %s284
          %287 = dma.hbm_to_vmem [thread:$0]  %s283, 128, %s285, %s273
        $region48: #{tpu_custom_call.1} parent=43 // pred_fallthru
          _
      $region44: #{tpu_custom_call.1} parent=5 // pred_fallthru
        _
      %p288 = scmp.le.s32.totalorder 1, %s21
      %p289 = scmp.lt.s32.totalorder %s21, 3
      %p290 = pnand %p288, %p289
      %p291 = pneg %p290
      // Predicated region
      $region49: #{tpu_custom_call.1} parent=5 // pred_check
        _
      $region50: #{tpu_custom_call.1} parent=5 // pred_check_branch
        %293 = sbr.rel (%p290) target = $region52
      $region51: #{tpu_custom_call.1} parent=5 // pred_region
        %s294 = ssub.s32 %s21, 1
        %s295 = sand.u32 %s34, 1
        %s296 = scalar_lea.sflag [#allocation3], %s295
        %s297 = sand.u32 %s34, 1
        %s298 = smul.addr %s297, 8
        %s299 = scalar_lea.vmem [#allocation2], %s298
        // Predicated region
        $region53: #{tpu_custom_call.1} parent=51 // pred_check
          %p300 = pneg %p47
        $region54: #{tpu_custom_call.1} parent=51 // pred_check_branch
          %302 = sbr.rel (%p300) target = $region56
        $region55: #{tpu_custom_call.1} parent=51 // pred_region
          %304 = dma.done %s296, 128
        $region56: #{tpu_custom_call.1} parent=51 // pred_fallthru
          _
        // Predicated region
        $region57: #{tpu_custom_call.1} parent=51 // pred_check
          %p305 = pneg %p131
        $region58: #{tpu_custom_call.1} parent=51 // pred_check_branch
          %307 = sbr.rel (%p305) target = $region60
        $region59: #{tpu_custom_call.1} parent=51 // pred_region
          %309 = dma.done [#allocation6], 64
        $region60: #{tpu_custom_call.1} parent=51 // pred_fallthru
          _
        %s310 = sand.u32 %s34, 1
        %s311 = scalar_lea.sflag [#allocation3], %s310
        %s312 = sand.u32 %s34, 1
        %s313 = smul.addr %s312, 8
        %s314 = scalar_lea.vmem [#allocation2], %s313
        %p315 = pneg %p47
        %p316 = pneg %p44
        %p317 = pneg %p68
        %p318 = pneg %p65
        %p319 = pneg %p89
        %p320 = pneg %p86
        %p321 = pneg %p110
        %p322 = pneg %p107
        %p323 = pneg %p131
        %p324 = pneg %p128
        %p325 = pneg %p152
        %p326 = pneg %p149
        %p327 = pneg %p173
        %p328 = pneg %p170
        %p329 = pneg %p194
        %p330 = pneg %p191
        %p331 = pneg %p220
        %p332 = pneg %p217
        %s333 = sand.u32 %s207, 1
        %s334 = scalar_lea.sflag [#allocation4], %s333
        %s335 = sand.u32 %s207, 1
        %s336 = smul.addr %s335, 8
        %s337 = scalar_lea.vmem [#allocation7], %s336
        %v338 = vld [vmem:[%s299] sm:$0xff]
        %v339 = vld [vmem:[%s1] sm:$0xff]
        %v340 = vld [vmem:[%s1 + $0x8] sm:$0xff]
        %v341 = vld [vmem:[%s1 + $0x10] sm:$0xff]
        %v342 = vld [vmem:[%s1 + $0x18] sm:$0xff]
        %v343 = vld [vmem:[%s2] sm:$0x1]
        %v345 = vperm.slane %v343, 0
        %vm347 = vcmask 261120
        %v349 = vsel %vm347, %v338, 0
        %351 = vmatpush.msra.mxu0 0.0
        %352 = vmatpush.msra.mxu0 0.0
        %353 = vmatpush.msra.mxu0 0.0
        %354 = vmatpush.msra.mxu0 0.0
        %355 = vmatpush.msra.mxu0 0.0
        %356 = vmatpush.msra.mxu0 0.0
        %357 = vmatpush.msra.mxu0 0.0
        %358 = vmatpush.msra.mxu0 0.0
        %359 = vmatpush.msra.mxu0 0.0
        %360 = vmatpush.msra.mxu0 0.0
        %361 = vmatpush.msra.mxu0 0.0
        %362 = vmatpush.msra.mxu0 0.0
        %363 = vmatpush.msra.mxu0 %v342
        %364 = vmatpush.msra.mxu0 %v341
        %365 = vmatpush.msra.mxu0 %v340
        %366 = vmatpush.msra.mxu0 %v339
        %367 = vmatmul.f32.gmra.mxu0 %v349
        %v368 = vpop.f32.mrf.mxu0
        %v369 = vadd.f32 %v345, %v368
        %370 = vdwg.mxu0
        %372 = vrot.lane.b32.xlu0 %v369, 120
        %v373 = vpop.permute.xlu0 %372
        %374 = vrot.lane.b32.xlu0 %v369, 112
        %v375 = vpop.permute.xlu0 %374
        %376 = vrot.lane.b32.xlu0 %v369, 104
        %v377 = vpop.permute.xlu0 %376
        %378 = vrot.lane.b32.xlu0 %v369, 96
        %v379 = vpop.permute.xlu0 %378
        %vm380 = vcmask 64512
        %v381 = vsel %vm380, %v369, 0
        %v383 = vsel %vm380, %v379, 0
        %385 = vmatpush.xpose.msra.mxu0 0.0
        %386 = vmatpush.xpose.msra.mxu0 0.0
        %387 = vmatpush.xpose.msra.mxu0 0.0
        %388 = vmatpush.xpose.msra.mxu0 0.0
        %389 = vmatpush.xpose.msra.mxu0 0.0
        %390 = vmatpush.xpose.msra.mxu0 0.0
        %391 = vmatpush.xpose.msra.mxu0 0.0
        %392 = vmatpush.xpose.msra.mxu0 0.0
        %393 = vmatpush.xpose.msra.mxu0 0.0
        %394 = vmatpush.xpose.msra.mxu0 0.0
        %395 = vmatpush.xpose.msra.mxu0 0.0
        %396 = vmatpush.xpose.msra.mxu0 0.0
        %397 = vmatpush.xpose.msra.mxu0 0.0
        %398 = vmatpush.xpose.msra.mxu0 0.0
        %399 = vmatpush.xpose.msra.mxu0 0.0
        %400 = vmatpush.xpose.msra.mxu0 %v383
        %401 = vmatmul.f32.gmra.mxu0 %v381
        %v402 = vpop.f32.mrf.mxu0
        %v403 = vadd.f32 0.0, %v402
        %404 = vdwg.mxu0
        %405 = vrot.lane.b32.xlu0 %v373, 96
        %v406 = vpop.permute.xlu0 %405
        %v407 = vsel %vm380, %v373, 0
        %v409 = vsel %vm380, %v406, 0
        %411 = vmatpush.xpose.msra.mxu0 0.0
        %412 = vmatpush.xpose.msra.mxu0 0.0
        %413 = vmatpush.xpose.msra.mxu0 0.0
        %414 = vmatpush.xpose.msra.mxu0 0.0
        %415 = vmatpush.xpose.msra.mxu0 0.0
        %416 = vmatpush.xpose.msra.mxu0 0.0
        %417 = vmatpush.xpose.msra.mxu0 0.0
        %418 = vmatpush.xpose.msra.mxu0 0.0
        %419 = vmatpush.xpose.msra.mxu0 0.0
        %420 = vmatpush.xpose.msra.mxu0 0.0
        %421 = vmatpush.xpose.msra.mxu0 0.0
        %422 = vmatpush.xpose.msra.mxu0 0.0
        %423 = vmatpush.xpose.msra.mxu0 0.0
        %424 = vmatpush.xpose.msra.mxu0 0.0
        %425 = vmatpush.xpose.msra.mxu0 0.0
        %426 = vmatpush.xpose.msra.mxu0 %v409
        %427 = vmatmul.f32.gmra.mxu0 %v407
        %v428 = vpop.f32.mrf.mxu0
        %v429 = vadd.f32 0.0, %v428
        %430 = vdwg.mxu0
        %431 = vrot.lane.b32.xlu0 %v375, 96
        %v432 = vpop.permute.xlu0 %431
        %v433 = vsel %vm380, %v375, 0
        %v435 = vsel %vm380, %v432, 0
        %437 = vmatpush.xpose.msra.mxu0 0.0
        %438 = vmatpush.xpose.msra.mxu0 0.0
        %439 = vmatpush.xpose.msra.mxu0 0.0
        %440 = vmatpush.xpose.msra.mxu0 0.0
        %441 = vmatpush.xpose.msra.mxu0 0.0
        %442 = vmatpush.xpose.msra.mxu0 0.0
        %443 = vmatpush.xpose.msra.mxu0 0.0
        %444 = vmatpush.xpose.msra.mxu0 0.0
        %445 = vmatpush.xpose.msra.mxu0 0.0
        %446 = vmatpush.xpose.msra.mxu0 0.0
        %447 = vmatpush.xpose.msra.mxu0 0.0
        %448 = vmatpush.xpose.msra.mxu0 0.0
        %449 = vmatpush.xpose.msra.mxu0 0.0
        %450 = vmatpush.xpose.msra.mxu0 0.0
        %451 = vmatpush.xpose.msra.mxu0 0.0
        %452 = vmatpush.xpose.msra.mxu0 %v435
        %453 = vmatmul.f32.gmra.mxu0 %v433
        %v454 = vpop.f32.mrf.mxu0
        %v455 = vadd.f32 0.0, %v454
        %456 = vdwg.mxu0
        %457 = vrot.lane.b32.xlu0 %v377, 96
        %v458 = vpop.permute.xlu0 %457
        %v459 = vsel %vm380, %v377, 0
        %v461 = vsel %vm380, %v458, 0
        %463 = vmatpush.xpose.msra.mxu0 0.0
        %464 = vmatpush.xpose.msra.mxu0 0.0
        %465 = vmatpush.xpose.msra.mxu0 0.0
        %466 = vmatpush.xpose.msra.mxu0 0.0
        %467 = vmatpush.xpose.msra.mxu0 0.0
        %468 = vmatpush.xpose.msra.mxu0 0.0
        %469 = vmatpush.xpose.msra.mxu0 0.0
        %470 = vmatpush.xpose.msra.mxu0 0.0
        %471 = vmatpush.xpose.msra.mxu0 0.0
        %472 = vmatpush.xpose.msra.mxu0 0.0
        %473 = vmatpush.xpose.msra.mxu0 0.0
        %474 = vmatpush.xpose.msra.mxu0 0.0
        %475 = vmatpush.xpose.msra.mxu0 0.0
        %476 = vmatpush.xpose.msra.mxu0 0.0
        %477 = vmatpush.xpose.msra.mxu0 0.0
        %478 = vmatpush.xpose.msra.mxu0 %v461
        %479 = vmatmul.f32.gmra.mxu0 %v459
        %v480 = vpop.f32.mrf.mxu0
        %v481 = vadd.f32 0.0, %v480
        %482 = vdwg.mxu0
        %v483 = vmul.f32 %v403, 0.35355338
        %v484 = vmul.f32 %v429, 0.35355338
        %v485 = vmul.f32 %v455, 0.35355338
        %v486 = vmul.f32 %v481, 0.35355338
        %v487 = vsel %vm380, %v483, -inf
        %488 = vmax.xlane.f32.xlu0 %v487
        %v489 = vpop.xlane.xlu0 %488
        %v490 = vsel %vm380, %v484, -inf
        %491 = vmax.xlane.f32.xlu0 %v490
        %v492 = vpop.xlane.xlu0 %491
        %v493 = vsel %vm380, %v485, -inf
        %494 = vmax.xlane.f32.xlu0 %v493
        %v495 = vpop.xlane.xlu0 %494
        %v496 = vsel %vm380, %v486, -inf
        %497 = vmax.xlane.f32.xlu0 %v496
        %v498 = vpop.xlane.xlu0 %497
        %v499 = vsub.f32 %v483, %v489
        %v500 = vsub.f32 %v484, %v492
        %v501 = vsub.f32 %v485, %v495
        %v502 = vsub.f32 %v486, %v498
        %v503 = vmul.f32 %v499, 1.442695
        %v504 = vpow.pop %v503
        %v505 = vmul.f32 %v500, 1.442695
        %v506 = vpow.pop %v505
        %v507 = vmul.f32 %v501, 1.442695
        %v508 = vpow.pop %v507
        %v509 = vmul.f32 %v502, 1.442695
        %v510 = vpow.pop %v509
        %v511 = vsel %vm380, %v504, 0.0
        %512 = vadd.xlane.f32.xlu0 %v511
        %v513 = vpop.xlane.xlu0 %512
        %v514 = vsel %vm380, %v506, 0.0
        %515 = vadd.xlane.f32.xlu0 %v514
        %v516 = vpop.xlane.xlu0 %515
        %v517 = vsel %vm380, %v508, 0.0
        %518 = vadd.xlane.f32.xlu0 %v517
        %v519 = vpop.xlane.xlu0 %518
        %v520 = vsel %vm380, %v510, 0.0
        %521 = vadd.xlane.f32.xlu0 %v520
        %v522 = vpop.xlane.xlu0 %521
        %v523 = vrcp.pop %v513
        %v524 = vrcp.pop %v516
        %v525 = vrcp.pop %v519
        %v526 = vrcp.pop %v522
        %v527 = vmul.f32 %v513, %v523
        %v528 = vmul.f32 %v516, %v524
        %v529 = vmul.f32 %v519, %v525
        %v530 = vmul.f32 %v522, %v526
        %v531 = vsub.f32 2.0, %v527
        %v532 = vsub.f32 2.0, %v528
        %v533 = vsub.f32 2.0, %v529
        %v534 = vsub.f32 2.0, %v530
        %v535 = vmul.f32 %v523, %v531
        %v536 = vmul.f32 %v524, %v532
        %v537 = vmul.f32 %v525, %v533
        %v538 = vmul.f32 %v526, %v534
        %v539 = vmul.f32 %v504, %v535
        %v540 = vmul.f32 %v506, %v536
        %v541 = vmul.f32 %v508, %v537
        %v542 = vmul.f32 %v510, %v538
        %543 = vrot.lane.b32.xlu0 %v369, 64
        %v544 = vpop.permute.xlu0 %543
        %v547 = vsel %vm380, %v539, 0
        %549 = vmatpush.msra.mxu0 0.0
        %550 = vmatpush.msra.mxu0 0.0
        %551 = vmatpush.msra.mxu0 0.0
        %552 = vmatpush.msra.mxu0 0.0
        %553 = vmatpush.msra.mxu0 0.0
        %554 = vmatpush.msra.mxu0 0.0
        %555 = vmatpush.msra.mxu0 0.0
        %556 = vmatpush.msra.mxu0 0.0
        %557 = vmatpush.msra.mxu0 0.0
        %558 = vmatpush.msra.mxu0 0.0
        %559 = vmatpush.msra.mxu0 0.0
        %560 = vmatpush.msra.mxu0 0.0
        %561 = vmatpush.msra.mxu0 0.0
        %562 = vmatpush.msra.mxu0 0.0
        %563 = vmatpush.msra.mxu0 0.0
        %564 = vmatpush.msra.mxu0 %v544
        %565 = vmatmul.f32.gmra.mxu0 %v547
        %v566 = vpop.f32.mrf.mxu0
        %v567 = vadd.f32 0.0, %v566
        %568 = vdwg.mxu0
        %569 = vrot.lane.b32.xlu0 %v373, 64
        %v570 = vpop.permute.xlu0 %569
        %v573 = vsel %vm380, %v540, 0
        %575 = vmatpush.msra.mxu0 0.0
        %576 = vmatpush.msra.mxu0 0.0
        %577 = vmatpush.msra.mxu0 0.0
        %578 = vmatpush.msra.mxu0 0.0
        %579 = vmatpush.msra.mxu0 0.0
        %580 = vmatpush.msra.mxu0 0.0
        %581 = vmatpush.msra.mxu0 0.0
        %582 = vmatpush.msra.mxu0 0.0
        %583 = vmatpush.msra.mxu0 0.0
        %584 = vmatpush.msra.mxu0 0.0
        %585 = vmatpush.msra.mxu0 0.0
        %586 = vmatpush.msra.mxu0 0.0
        %587 = vmatpush.msra.mxu0 0.0
        %588 = vmatpush.msra.mxu0 0.0
        %589 = vmatpush.msra.mxu0 0.0
        %590 = vmatpush.msra.mxu0 %v570
        %591 = vmatmul.f32.gmra.mxu0 %v573
        %v592 = vpop.f32.mrf.mxu0
        %v593 = vadd.f32 0.0, %v592
        %594 = vdwg.mxu0
        %595 = vrot.lane.b32.xlu0 %v375, 64
        %v596 = vpop.permute.xlu0 %595
        %v599 = vsel %vm380, %v541, 0
        %601 = vmatpush.msra.mxu0 0.0
        %602 = vmatpush.msra.mxu0 0.0
        %603 = vmatpush.msra.mxu0 0.0
        %604 = vmatpush.msra.mxu0 0.0
        %605 = vmatpush.msra.mxu0 0.0
        %606 = vmatpush.msra.mxu0 0.0
        %607 = vmatpush.msra.mxu0 0.0
        %608 = vmatpush.msra.mxu0 0.0
        %609 = vmatpush.msra.mxu0 0.0
        %610 = vmatpush.msra.mxu0 0.0
        %611 = vmatpush.msra.mxu0 0.0
        %612 = vmatpush.msra.mxu0 0.0
        %613 = vmatpush.msra.mxu0 0.0
        %614 = vmatpush.msra.mxu0 0.0
        %615 = vmatpush.msra.mxu0 0.0
        %616 = vmatpush.msra.mxu0 %v596
        %617 = vmatmul.f32.gmra.mxu0 %v599
        %v618 = vpop.f32.mrf.mxu0
        %v619 = vadd.f32 0.0, %v618
        %620 = vdwg.mxu0
        %621 = vrot.lane.b32.xlu0 %v377, 64
        %v622 = vpop.permute.xlu0 %621
        %v625 = vsel %vm380, %v542, 0
        %627 = vmatpush.msra.mxu0 0.0
        %628 = vmatpush.msra.mxu0 0.0
        %629 = vmatpush.msra.mxu0 0.0
        %630 = vmatpush.msra.mxu0 0.0
        %631 = vmatpush.msra.mxu0 0.0
        %632 = vmatpush.msra.mxu0 0.0
        %633 = vmatpush.msra.mxu0 0.0
        %634 = vmatpush.msra.mxu0 0.0
        %635 = vmatpush.msra.mxu0 0.0
        %636 = vmatpush.msra.mxu0 0.0
        %637 = vmatpush.msra.mxu0 0.0
        %638 = vmatpush.msra.mxu0 0.0
        %639 = vmatpush.msra.mxu0 0.0
        %640 = vmatpush.msra.mxu0 0.0
        %641 = vmatpush.msra.mxu0 0.0
        %642 = vmatpush.msra.mxu0 %v622
        %643 = vmatmul.f32.gmra.mxu0 %v625
        %v644 = vpop.f32.mrf.mxu0
        %v645 = vadd.f32 0.0, %v644
        %646 = vdwg.mxu0
        %v647 = vld [vmem:[#allocation5] sm:$0xf]
        %v648 = vld [vmem:[%s3] sm:$0xff]
        %v649 = vld [vmem:[%s3 + $0x8] sm:$0xff]
        %v650 = vld [vmem:[%s3 + $0x10] sm:$0xff]
        %v651 = vld [vmem:[%s3 + $0x18] sm:$0xff]
        %v653 = vsel %vm380, %v567, 0
        %655 = vmatpush.msra.mxu0 0.0
        %656 = vmatpush.msra.mxu0 0.0
        %657 = vmatpush.msra.mxu0 0.0
        %658 = vmatpush.msra.mxu0 0.0
        %659 = vmatpush.msra.mxu0 0.0
        %660 = vmatpush.msra.mxu0 0.0
        %661 = vmatpush.msra.mxu0 0.0
        %662 = vmatpush.msra.mxu0 0.0
        %663 = vmatpush.msra.mxu0 0.0
        %664 = vmatpush.msra.mxu0 0.0
        %665 = vmatpush.msra.mxu0 0.0
        %666 = vmatpush.msra.mxu0 0.0
        %667 = vmatpush.msra.mxu0 0.0
        %668 = vmatpush.msra.mxu0 0.0
        %669 = vmatpush.msra.mxu0 0.0
        %670 = vmatpush.msra.mxu0 %v648
        %671 = vmatmul.f32.gmra.mxu0 %v653
        %v672 = vpop.f32.mrf.mxu0
        %v673 = vadd.f32 0.0, %v672
        %674 = vdwg.mxu0
        %v676 = vsel %vm380, %v593, 0
        %678 = vmatpush.msra.mxu0 0.0
        %679 = vmatpush.msra.mxu0 0.0
        %680 = vmatpush.msra.mxu0 0.0
        %681 = vmatpush.msra.mxu0 0.0
        %682 = vmatpush.msra.mxu0 0.0
        %683 = vmatpush.msra.mxu0 0.0
        %684 = vmatpush.msra.mxu0 0.0
        %685 = vmatpush.msra.mxu0 0.0
        %686 = vmatpush.msra.mxu0 0.0
        %687 = vmatpush.msra.mxu0 0.0
        %688 = vmatpush.msra.mxu0 0.0
        %689 = vmatpush.msra.mxu0 0.0
        %690 = vmatpush.msra.mxu0 0.0
        %691 = vmatpush.msra.mxu0 0.0
        %692 = vmatpush.msra.mxu0 0.0
        %693 = vmatpush.msra.mxu0 %v649
        %694 = vmatmul.f32.gmra.mxu0 %v676
        %v695 = vpop.f32.mrf.mxu0
        %v696 = vadd.f32 0.0, %v695
        %697 = vdwg.mxu0
        %v699 = vsel %vm380, %v619, 0
        %701 = vmatpush.msra.mxu0 0.0
        %702 = vmatpush.msra.mxu0 0.0
        %703 = vmatpush.msra.mxu0 0.0
        %704 = vmatpush.msra.mxu0 0.0
        %705 = vmatpush.msra.mxu0 0.0
        %706 = vmatpush.msra.mxu0 0.0
        %707 = vmatpush.msra.mxu0 0.0
        %708 = vmatpush.msra.mxu0 0.0
        %709 = vmatpush.msra.mxu0 0.0
        %710 = vmatpush.msra.mxu0 0.0
        %711 = vmatpush.msra.mxu0 0.0
        %712 = vmatpush.msra.mxu0 0.0
        %713 = vmatpush.msra.mxu0 0.0
        %714 = vmatpush.msra.mxu0 0.0
        %715 = vmatpush.msra.mxu0 0.0
        %716 = vmatpush.msra.mxu0 %v650
        %717 = vmatmul.f32.gmra.mxu0 %v699
        %v718 = vpop.f32.mrf.mxu0
        %v719 = vadd.f32 0.0, %v718
        %720 = vdwg.mxu0
        %v722 = vsel %vm380, %v645, 0
        %724 = vmatpush.msra.mxu0 0.0
        %725 = vmatpush.msra.mxu0 0.0
        %726 = vmatpush.msra.mxu0 0.0
        %727 = vmatpush.msra.mxu0 0.0
        %728 = vmatpush.msra.mxu0 0.0
        %729 = vmatpush.msra.mxu0 0.0
        %730 = vmatpush.msra.mxu0 0.0
        %731 = vmatpush.msra.mxu0 0.0
        %732 = vmatpush.msra.mxu0 0.0
        %733 = vmatpush.msra.mxu0 0.0
        %734 = vmatpush.msra.mxu0 0.0
        %735 = vmatpush.msra.mxu0 0.0
        %736 = vmatpush.msra.mxu0 0.0
        %737 = vmatpush.msra.mxu0 0.0
        %738 = vmatpush.msra.mxu0 0.0
        %739 = vmatpush.msra.mxu0 %v651
        %740 = vmatmul.f32.gmra.mxu0 %v722
        %v741 = vpop.f32.mrf.mxu0
        %v742 = vadd.f32 0.0, %v741
        %743 = vdwg.mxu0
        %v744 = vsel %vm347, %v673, 0.0
        %v745 = vsel %vm347, %v696, 0.0
        %v746 = vadd.f32 %v744, %v745
        %v747 = vsel %vm347, %v719, 0.0
        %v748 = vadd.f32 %v746, %v747
        %v749 = vsel %vm347, %v742, 0.0
        %v750 = vadd.f32 %v748, %v749
        %v751 = vperm.slane %v647, 0
        %v752 = vadd.f32 %v750, %v751
        %v753 = vadd.f32 %v752, %v338
        %v754 = vsel %vm347, %v753, 0.0
        %755 = vadd.xlane.f32.xlu0 %v754
        %v756 = vpop.xlane.xlu0 %755
        %v757 = vrcp.pop 32.0
        %v758 = vmul.f32 32.0, %v757
        %v759 = vsub.f32 1.0, %v758
        %v760 = vmul.f32 %v757, %v759
        %v761 = vadd.f32 %v757, %v760
        %vm762 = vweird.f32 %v757
        %v763 = vsel %vm762, %v757, %v761
        %v764 = vmul.f32 %v756, %v763
        %v765 = vsub.f32 %v753, %v764
        %v766 = vmul.f32 %v765, %v765
        %v767 = vsel %vm347, %v766, 0.0
        %768 = vadd.xlane.f32.xlu0 %v767
        %v769 = vpop.xlane.xlu0 %768
        %v770 = vmul.f32 %v769, %v763
        %v771 = vadd.f32 %v770, 1e-05
        %v772 = vrsqrt.pop %v771
        %v773 = vmul.f32 %v772, %v771
        %v774 = vmul.f32 %v773, %v772
        %v775 = vmul.f32 0.5, %v774
        %v776 = vsub.f32 1.5, %v775
        %v777 = vmul.f32 %v772, %v776
        %vm778 = vweird.f32 %v771
        %vm779 = vweird.f32 %v772
        %vm780 = vmor %vm778, %vm779
        %v781 = vsel %vm780, %v772, %v777
        %v782 = vmul.f32 %v765, %v781
        %v783 = vperm.slane %v647, 1
        %v784 = vmul.f32 %v782, %v783
        %v785 = vperm.slane %v647, 2
        %v786 = vadd.f32 %v784, %v785
        %v787 = vld [vmem:[%s5] sm:$0xff]
        %v788 = vld [vmem:[%s5 + $0x8] sm:$0xff]
        %v789 = vld [vmem:[%s5 + $0x10] sm:$0xff]
        %v790 = vld [vmem:[%s5 + $0x18] sm:$0xff]
        %v791 = vld [vmem:[%s6] sm:$0x1]
        %v793 = vperm.slane %v791, 0
        %v796 = vsel %vm347, %v786, 0
        %798 = vmatpush.msra.mxu0 0.0
        %799 = vmatpush.msra.mxu0 0.0
        %800 = vmatpush.msra.mxu0 0.0
        %801 = vmatpush.msra.mxu0 0.0
        %802 = vmatpush.msra.mxu0 0.0
        %803 = vmatpush.msra.mxu0 0.0
        %804 = vmatpush.msra.mxu0 0.0
        %805 = vmatpush.msra.mxu0 0.0
        %806 = vmatpush.msra.mxu0 0.0
        %807 = vmatpush.msra.mxu0 0.0
        %808 = vmatpush.msra.mxu0 0.0
        %809 = vmatpush.msra.mxu0 0.0
        %810 = vmatpush.msra.mxu0 %v790
        %811 = vmatpush.msra.mxu0 %v789
        %812 = vmatpush.msra.mxu0 %v788
        %813 = vmatpush.msra.mxu0 %v787
        %814 = vmatmul.f32.gmra.mxu0 %v796
        %v815 = vpop.f32.mrf.mxu0
        %v816 = vadd.f32 %v793, %v815
        %817 = vdwg.mxu0
        %v818 = vmax.f32 %v816, 0.0
        %v819 = vld [vmem:[%s7] sm:$0xff]
        %v820 = vld [vmem:[%s7 + $0x8] sm:$0xff]
        %v821 = vld [vmem:[%s7 + $0x10] sm:$0xff]
        %v822 = vld [vmem:[%s7 + $0x18] sm:$0xff]
        %v823 = vld [vmem:[%s7 + $0x20] sm:$0xff]
        %v824 = vld [vmem:[%s7 + $0x28] sm:$0xff]
        %v825 = vld [vmem:[%s7 + $0x30] sm:$0xff]
        %v826 = vld [vmem:[%s7 + $0x38] sm:$0xff]
        %v827 = vperm.slane %v647, 3
        %vm828 = vcmask 523264
        %v830 = vsel %vm828, %v818, 0
        %832 = vmatpush.msra.mxu0 0.0
        %833 = vmatpush.msra.mxu0 0.0
        %834 = vmatpush.msra.mxu0 0.0
        %835 = vmatpush.msra.mxu0 0.0
        %836 = vmatpush.msra.mxu0 0.0
        %837 = vmatpush.msra.mxu0 0.0
        %838 = vmatpush.msra.mxu0 0.0
        %839 = vmatpush.msra.mxu0 0.0
        %840 = vmatpush.msra.mxu0 %v826
        %841 = vmatpush.msra.mxu0 %v825
        %842 = vmatpush.msra.mxu0 %v824
        %843 = vmatpush.msra.mxu0 %v823
        %844 = vmatpush.msra.mxu0 %v822
        %845 = vmatpush.msra.mxu0 %v821
        %846 = vmatpush.msra.mxu0 %v820
        %847 = vmatpush.msra.mxu0 %v819
        %848 = vmatmul.f32.gmra.mxu0 %v830
        %v849 = vpop.f32.mrf.mxu0
        %v850 = vadd.f32 %v827, %v849
        %851 = vdwg.mxu0
        %852 = vst.msk [vmem:[%s337] sm:$0xff] %vm347, %v850
        %s853 = sand.u32 %s207, 1
        %s854 = scalar_lea.sflag [#allocation4], %s853
        %s855 = sand.u32 %s207, 1
        %s856 = smul.addr %s855, 8
        %s857 = scalar_lea.vmem [#allocation7], %s856
        // Predicated region
        $region61: #{tpu_custom_call.1} parent=51 // pred_check
          %p858 = pneg %p217
        $region62: #{tpu_custom_call.1} parent=51 // pred_check_branch
          %860 = sbr.rel (%p858) target = $region64
        $region63: #{tpu_custom_call.1} parent=51 // pred_region
          %862 = vsyncadd %s854, 0
          %s863 = smul.addr %s26, 8
          %s864 = scalar_lea.hbm %s8, %s863
          %s866 = sshll.u32 %s857, 4
          %s867 = int_to_ptr.vmem [resolvable:$true] %s866
          %s868 = sshll.u32 %s864, 4
          %s869 = int_to_ptr.hbm [resolvable:$true] %s868
          %871 = dma.vmem_to_hbm [thread:$0]  %s867, 128, %s869, %s854
        $region64: #{tpu_custom_call.1} parent=51 // pred_fallthru
          _
      $region52: #{tpu_custom_call.1} parent=5 // pred_fallthru
        _
      %p872 = scmp.le.s32.totalorder 2, %s21
      // Predicated region
      $region65: #{tpu_custom_call.1} parent=5 // pred_check
        %p873 = pneg %p872
      $region66: #{tpu_custom_call.1} parent=5 // pred_check_branch
        %875 = sbr.rel (%p873) target = $region68
      $region67: #{tpu_custom_call.1} parent=5 // pred_region
        %s876 = ssub.s32 %s21, 2
        // Predicated region
        $region69: #{tpu_custom_call.1} parent=67 // pred_check
          %p877 = pneg %p223
        $region70: #{tpu_custom_call.1} parent=67 // pred_check_branch
          %879 = sbr.rel (%p877) target = $region72
        $region71: #{tpu_custom_call.1} parent=67 // pred_region
          %s880 = sand.u32 %s208, 1
          %s881 = scalar_lea.sflag [#allocation4], %s880
          %s882 = sand.u32 %s208, 1
          %s883 = smul.addr %s882, 8
          %s884 = scalar_lea.vmem [#allocation7], %s883
          %886 = dma.done %s881, 128
        $region72: #{tpu_custom_call.1} parent=67 // pred_fallthru
          _
      $region68: #{tpu_custom_call.1} parent=5 // pred_fallthru
        _
    $region6: #{tpu_custom_call.1} parent=1 // loop_footer
      %s25 = sadd.s32 1, %s21
    $region7: #{tpu_custom_call.1} parent=1 // loop_footer_branch
      %20 = sbr.rel target = $region3
    $region8: #{tpu_custom_call.1} parent=1 // loop_exit
      _
    %887 = vsyncpa [#allocation3], 1
    %s888 = scalar_lea.sflag [#allocation3], 1
    %889 = vsyncpa %s888, 1
    %890 = vsyncpa [#allocation6], 1
    %891 = vsyncpa [#allocation4], 1
    %s892 = scalar_lea.sflag [#allocation4], 1
    %893 = vsyncpa %s892, 1

</llo_original>
